<compile_context>
chip_gen: v6e
topology: v6e:2x2x1
jax: 0.10.0
libtpu: 0.0.40
codegen_flags: <defaults>
</compile_context>

<pallas_src>
import functools

import jax
import jax.numpy as jnp
from jax import lax
from jax.experimental import pallas as pl
from jax.experimental.pallas import tpu as pltpu


def _round_up(x, m):
    return ((x + m - 1) // m) * m


def _vmem_tile_bytes(rows, cols, itemsize):
    """Approximate VMEM footprint of a (rows, cols) buffer: last dim pads to a
    128-lane vreg, second-last dim to 8 sublanes."""
    return _round_up(max(int(rows), 1), 8) * _round_up(max(int(cols), 1), 128) * itemsize


def _vmem_capacity_bytes():
    try:
        return int(pltpu.get_tpu_info().vmem_capacity_bytes)
    except Exception:
        return 64 * 1024 * 1024  # conservative: v7x per-TensorCore VMEM


# --------------- resident-weight path (small / medium hid_dim) ---------------

def _logreg_kernel(x_ref, w_ref, b_ref, o_ref):
    # x_ref: (TM, H)  w_ref: (C, H)  b_ref: (1, C)  o_ref: (TM, C)
    acc = lax.dot_general(
        x_ref[...], w_ref[...],
        dimension_numbers=(((1,), (1,)), ((), ())),   # contract on H: MXU trans-B
        preferred_element_type=jnp.float32,
    )
    o_ref[...] = (acc + b_ref[...].astype(jnp.float32)).astype(o_ref.dtype)


# ------------------- K-tiled path (embedding-sized hid_dim) ------------------

def _logreg_kernel_ktiled(x_ref, w_ref, b_ref, o_ref, acc_ref, *, h_total, tk):
    k = pl.program_id(1)

    @pl.when(k == 0)
    def _():
        acc_ref[...] = jnp.zeros_like(acc_ref)

    # Mask the ragged last K block: columns beyond H are uninitialized VMEM in
    # BOTH the x and W tiles, so zero them before they hit the accumulator.
    valid = h_total - k * tk
    x = x_ref[...]
    w = w_ref[...]
    x = jnp.where(lax.broadcasted_iota(jnp.int32, x.shape, 1) < valid, x, 0).astype(x.dtype)
    w = jnp.where(lax.broadcasted_iota(jnp.int32, w.shape, 1) < valid, w, 0).astype(w.dtype)

    acc_ref[...] += lax.dot_general(
        x, w,
        dimension_numbers=(((1,), (1,)), ((), ())),
        preferred_element_type=jnp.float32,
    )

    @pl.when(k == pl.num_programs(1) - 1)
    def _():
        o_ref[...] = (acc_ref[...] + b_ref[...].astype(jnp.float32)).astype(o_ref.dtype)


# --------------------------------- wrapper -----------------------------------

def _choose_tm(H, C, x_isz, out_isz, budget_bytes, cap=4096):
    """Largest multiple-of-8 batch tile whose double-buffered x/out tiles plus
    the (double-buffered) resident weight/bias fit the VMEM budget."""
    resident = 2 * (_vmem_tile_bytes(C, H, x_isz) + _vmem_tile_bytes(1, C, out_isz))
    per_row = 2 * (_round_up(H, 128) * x_isz + _round_up(C, 128) * out_isz)
    tm = max(budget_bytes - resident, per_row) // max(per_row, 1)
    return max(8, min(cap, (int(tm) // 8) * 8))


def logreg_forward(x, weight, bias, *, tm=None, tk=None, stream_bf16=False):
    """x: [B, H], weight: [C, H] (PyTorch nn.Linear layout), bias: [C] -> [B, C]."""
    B, H = x.shape
    C = weight.shape[0]
    out_dtype = x.dtype

    # Optional bf16 streaming: halves HBM read bytes (v6e/v7x), f32 accumulate.
    if stream_bf16:
        x = x.astype(jnp.bfloat16)
        weight = weight.astype(jnp.bfloat16)

    bias2d = bias.reshape(1, C)

    x_isz = jnp.dtype(x.dtype).itemsize
    out_isz = jnp.dtype(out_dtype).itemsize

    # Generation-aware VMEM budgeting (v5e/v6e: 128 MiB, v7x: 64 MiB per TC).
    vmem_cap = _vmem_capacity_bytes()
    budget = min(vmem_cap // 4, 24 * 1024 * 1024)
    vmem_limit = min(vmem_cap // 2, 32 * 1024 * 1024)

    # Guard: if the double-buffered resident weight would eat the budget,
    # switch to the K-tiled accumulator path instead of clamping TM to 8.
    resident_w = 2 * _vmem_tile_bytes(C, H, x_isz)
    use_ktile = (tk is not None) or (resident_w > budget // 4)

    if use_ktile:
        if tk is None:
            tk = min(512, _round_up(H, 128))
        else:
            tk = max(128, (int(tk) // 128) * 128)  # keep the lane dim 128-aligned
        if tm is None:
            per_row = (2 * _round_up(tk, 128) * x_isz      # x tiles (double-buffered)
                       + 2 * _round_up(C, 128) * out_isz   # out tiles
                       + _round_up(C, 128) * 4)            # f32 accumulator scratch
            resident = 2 * (_vmem_tile_bytes(C, tk, x_isz)
                            + _vmem_tile_bytes(1, C, out_isz))
            tm = max(budget - resident, per_row) // max(per_row, 1)
            tm = max(8, min(2048, (int(tm) // 8) * 8))
    else:
        if tm is None:
            tm = _choose_tm(H, C, x_isz, out_isz, budget)

    # Clamp the batch tile: full-extent block for tiny batches, otherwise a
    # sublane-aligned tile no larger than the (rounded-up) batch.
    tm_eff = B if B <= 8 else max(8, min((int(tm) // 8) * 8, _round_up(B, 8)))
    grid_m = pl.cdiv(B, tm_eff)

    cost = pl.CostEstimate(
        flops=2 * B * H * C,
        transcendentals=0,
        bytes_accessed=x_isz * (B * H + C * H) + out_isz * B * C,
    )

    if not use_ktile:
        out = pl.pallas_call(
            _logreg_kernel,
            out_shape=jax.ShapeDtypeStruct((B, C), out_dtype),
            grid_spec=pltpu.PrefetchScalarGridSpec(
                num_scalar_prefetch=0,
                grid=(grid_m,),
                in_specs=[
                    pl.BlockSpec((tm_eff, H), lambda i: (i, 0)),   # streamed x tiles
                    pl.BlockSpec((C, H), lambda i: (0, 0)),        # resident weight
                    pl.BlockSpec((1, C), lambda i: (0, 0)),        # resident bias
                ],
                out_specs=pl.BlockSpec((tm_eff, C), lambda i: (i, 0)),
            ),
            compiler_params=pltpu.CompilerParams(
                dimension_semantics=("parallel",),   # v7x: both TCs split batch tiles
                vmem_limit_bytes=vmem_limit,
            ),
            cost_estimate=cost,
        )(x, weight, bias2d)
        return out

    grid_k = pl.cdiv(H, tk)
    kernel = functools.partial(_logreg_kernel_ktiled, h_total=H, tk=tk)
    out = pl.pallas_call(
        kernel,
        out_shape=jax.ShapeDtypeStruct((B, C), out_dtype),
        grid_spec=pltpu.PrefetchScalarGridSpec(
            num_scalar_prefetch=0,
            grid=(grid_m, grid_k),
            in_specs=[
                pl.BlockSpec((tm_eff, tk), lambda i, k: (i, k)),   # x tiles
                pl.BlockSpec((C, tk), lambda i, k: (0, k)),        # weight K-slabs
                pl.BlockSpec((1, C), lambda i, k: (0, 0)),         # resident bias
            ],
            out_specs=pl.BlockSpec((tm_eff, C), lambda i, k: (i, 0)),
            scratch_shapes=[pltpu.VMEM((tm_eff, C), jnp.float32)],
        ),
        compiler_params=pltpu.CompilerParams(
            dimension_semantics=("parallel", "arbitrary"),
            vmem_limit_bytes=vmem_limit,
        ),
        cost_estimate=cost,
    )(x, weight, bias2d)
    return out


if __name__ == "__main__":
    # Small shapes consistent with LogReg(hid_dim, n_classes)
    batch, hid_dim, n_classes = 8, 32, 8

    key = jax.random.PRNGKey(0)
    kx, kw, kb = jax.random.split(key, 3)

    x = jax.random.normal(kx, (batch, hid_dim), dtype=jnp.float32)
    # Deterministic params mimicking nn.Linear's uniform(-1/sqrt(H), 1/sqrt(H))
    bound = 1.0 / (hid_dim ** 0.5)
    weight = jax.random.uniform(kw, (n_classes, hid_dim), dtype=jnp.float32,
                                minval=-bound, maxval=bound)
    bias = jax.random.uniform(kb, (n_classes,), dtype=jnp.float32,
                              minval=-bound, maxval=bound)

    # 1) Single-tile path (B <= 8): full-extent blocks.
    out = logreg_forward(x, weight, bias)
    jax.block_until_ready(out)
    ref = x @ weight.T + bias
    assert out.shape == (batch, n_classes)
    assert jnp.allclose(out, ref, atol=1e-5, rtol=1e-5)

    # 2) Tiled ragged-batch path (grid > 1, no wrapper-side padding).
    x2 = jax.random.normal(jax.random.PRNGKey(1), (20, hid_dim), dtype=jnp.float32)
    out2 = logreg_forward(x2, weight, bias, tm=8)
    jax.block_until_ready(out2)
    ref2 = x2 @ weight.T + bias
    assert out2.shape == (20, n_classes)
    assert jnp.allclose(out2, ref2, atol=1e-5, rtol=1e-5)

    # 3) Optional bf16 streaming path (f32 accumulate, f32 output).
    out3 = logreg_forward(x, weight, bias, stream_bf16=True)
    jax.block_until_ready(out3)
    assert out3.shape == (batch, n_classes)
    assert jnp.allclose(out3, ref, atol=2e-2, rtol=2e-2)

    # 4) K-tiled fallback (forced): ragged batch AND ragged K with in-kernel mask.
    H4 = 200
    k4x, k4w, k4b = jax.random.split(jax.random.PRNGKey(2), 3)
    x4 = jax.random.normal(k4x, (20, H4), dtype=jnp.float32)
    b4 = 1.0 / (H4 ** 0.5)
    w4 = jax.random.uniform(k4w, (n_classes, H4), dtype=jnp.float32,
                            minval=-b4, maxval=b4)
    bias4 = jax.random.uniform(k4b, (n_classes,), dtype=jnp.float32,
                               minval=-b4, maxval=b4)
    out4 = logreg_forward(x4, w4, bias4, tm=8, tk=128)
    jax.block_until_ready(out4)
    ref4 = x4 @ w4.T + bias4
    assert out4.shape == (20, n_classes)
    assert jnp.allclose(out4, ref4, atol=1e-4, rtol=1e-4)

    print("KERNEL_OK")
</pallas_src>

<mosaic_0001>
module attributes {stable_mosaic.version = 11 : i64} {
  func.func @_logreg_kernel(%arg0: i32, %arg1: memref<8x32xf32, #tpu.memory_space<vmem>>, %arg2: memref<8x32xf32, #tpu.memory_space<vmem>>, %arg3: memref<1x8xf32, #tpu.memory_space<vmem>>, %arg4: memref<8x8xf32, #tpu.memory_space<vmem>>) attributes {dimension_semantics = [#tpu.dimension_semantics<parallel>], iteration_bounds = array<i64: 1>, scalar_prefetch = 0 : i64, scratch_operands = 0 : i64, tpu.core_type = #tpu.core_type<tc>, window_params = [{transform_indices = @transform_0, window_bounds = array<i64: 8, 32>}, {pipeline_mode = #tpu.pipeline_mode<synchronous>, transform_indices = @transform_1, window_bounds = array<i64: 8, 32>}, {pipeline_mode = #tpu.pipeline_mode<synchronous>, transform_indices = @transform_2, window_bounds = array<i64: 1, 8>}, {transform_indices = @transform_3, window_bounds = array<i64: 8, 8>}]} {
    %c0 = arith.constant 0 : index
    %c0_0 = arith.constant 0 : index
    %0 = vector.load %arg1[%c0, %c0_0] : memref<8x32xf32, #tpu.memory_space<vmem>>, vector<8x32xf32>
    %c0_1 = arith.constant 0 : index
    %c0_2 = arith.constant 0 : index
    %1 = vector.load %arg2[%c0_1, %c0_2] : memref<8x32xf32, #tpu.memory_space<vmem>>, vector<8x32xf32>
    %cst = arith.constant dense<0.000000e+00> : vector<8x8xf32>
    %2 = tpu.matmul %0, %1, %cst {dimension_numbers = #tpu.dot_dimension_numbers<[1], [1], [0], [0], [0, 0, 1, 0], [], []>} : vector<8x32xf32>, vector<8x32xf32>, vector<8x8xf32> -> vector<8x8xf32>
    %c0_3 = arith.constant 0 : index
    %c0_4 = arith.constant 0 : index
    %3 = vector.load %arg3[%c0_3, %c0_4] : memref<1x8xf32, #tpu.memory_space<vmem>>, vector<1x8xf32>
    %4 = vector.broadcast %3 : vector<1x8xf32> to vector<8x8xf32>
    %5 = arith.addf %2, %4 : vector<8x8xf32>
    %c0_5 = arith.constant 0 : index
    %c0_6 = arith.constant 0 : index
    %6 = vector.load %arg4[%c0_5, %c0_6] : memref<8x8xf32, #tpu.memory_space<vmem>>, vector<8x8xf32>
    tpu.vector_store %arg4[%c0_5, %c0_6], %5 {strides = array<i32>} : memref<8x8xf32, #tpu.memory_space<vmem>>, vector<8x8xf32>,
    return
  }
  func.func @transform_0(%arg0: i32) -> (i32, i32) {
    %c0_i32 = arith.constant 0 : i32
    %c0_i32_0 = arith.constant 0 : i32
    return %arg0, %c0_i32 : i32, i32
  }
  func.func @transform_1(%arg0: i32) -> (i32, i32) {
    %c0_i32 = arith.constant 0 : i32
    %c0_i32_0 = arith.constant 0 : i32
    %c0_i32_1 = arith.constant 0 : i32
    return %c0_i32, %c0_i32_0 : i32, i32
  }
  func.func @transform_2(%arg0: i32) -> (i32, i32) {
    %c0_i32 = arith.constant 0 : i32
    %c0_i32_0 = arith.constant 0 : i32
    %c0_i32_1 = arith.constant 0 : i32
    return %c0_i32, %c0_i32_0 : i32, i32
  }
  func.func @transform_3(%arg0: i32) -> (i32, i32) {
    %c0_i32 = arith.constant 0 : i32
    %c0_i32_0 = arith.constant 0 : i32
    return %arg0, %c0_i32 : i32, i32
  }
}

</mosaic_0001>

<llo_original>
// kernel: tpu_custom_call.1
$region0: #{tpu_custom_call.1}
  #allocation0 [shape = 'u32[]', space=smem, size = 0x4, offset = 0x4, fixed_abs, tag = 'smem constant byte address 0x4 - core index']
  #allocation1 [shape = 'u32[144,128]{1,0:T(1,128)}', space=vmem, size = 0x12000, scoped, tag = 'internal scratch']
  %s0 = inlined_call_operand.hbm [shape: f32[8,32], index: 0, kind: input, shape index: {}]
  %s1 = inlined_call_operand.hbm [shape: f32[8,32], index: 1, kind: input, shape index: {}]
  %s2 = inlined_call_operand.vmem [shape: f32[1,8], index: 2, kind: input, shape index: {}]
  %s3 = inlined_call_operand.hbm [shape: f32[8,8], index: 3, kind: output, shape index: {}]
  %s4 = sld [smem:[#allocation0]]
  $region30: #{tpu_custom_call.1} parent=0
    _
  %s6 = ssub.s32 1, %s4
  %s7 = scalar_select 0, %s6, %s4
  $region1: #{tpu_custom_call.1} parent=0
    #allocation2 [shape = 'u8[4096]{0}', space=vmem, size = 0x1000, scoped, tag = 'input window, operand 0, single buffered']
    #allocation3 [shape = 's32[1]{0}', space=sflag, size = 0x4, scoped, tag = 'scoped memory for tpu_custom_call.1']
    #allocation4 [shape = 's32[1]{0}', space=sflag, size = 0x4, scoped, tag = 'scoped memory for tpu_custom_call.1']
    #allocation5 [shape = 'u8[4096]{0}', space=vmem, size = 0x1000, scoped, tag = 'input window, operand 1, single buffered']
    #allocation6 [shape = 's32[1]{0}', space=sflag, size = 0x4, scoped, tag = 'scoped memory for tpu_custom_call.1']
    #allocation7 [shape = 'u8[4096]{0}', space=vmem, size = 0x1000, scoped, tag = 'output window, operand 0, single buffered']
    %8 = vsyncpa [#allocation3], 0
    %9 = vsyncpa [#allocation6], 0
    %10 = vsyncpa [#allocation4], 0
    // Predicated region
    $region2: #{tpu_custom_call.1} parent=1 // pred_check
      _
    $region3: #{tpu_custom_call.1} parent=1 // pred_check_branch
      %12 = sbr.rel (0) target = $region5
    $region4: #{tpu_custom_call.1} parent=1 // pred_region
      %s14 = ssub.s32 128, 128
      %15 = vsyncadd [#allocation3], %s14
      %s17 = sshll.u32 [#allocation2], 4
      %s18 = int_to_ptr.vmem [resolvable:$true] %s17
      %20 = dma.hbm_to_vmem [thread:$0]  %s0, 128, %s18, [#allocation3]
    $region5: #{tpu_custom_call.1} parent=1 // pred_fallthru
      _
    // Predicated region
    $region6: #{tpu_custom_call.1} parent=1 // pred_check
      _
    $region7: #{tpu_custom_call.1} parent=1 // pred_check_branch
      %22 = sbr.rel (0) target = $region9
    $region8: #{tpu_custom_call.1} parent=1 // pred_region
      %s24 = ssub.s32 128, 128
      %25 = vsyncadd [#allocation6], %s24
      %s27 = sshll.u32 [#allocation5], 4
      %s28 = int_to_ptr.vmem [resolvable:$true] %s27
      %30 = dma.hbm_to_vmem [thread:$0]  %s1, 128, %s28, [#allocation6]
    $region9: #{tpu_custom_call.1} parent=1 // pred_fallthru
      _
    // Predicated region
    $region10: #{tpu_custom_call.1} parent=1 // pred_check
      _
    $region11: #{tpu_custom_call.1} parent=1 // pred_check_branch
      %32 = sbr.rel (0) target = $region13
    $region12: #{tpu_custom_call.1} parent=1 // pred_region
      _
    $region13: #{tpu_custom_call.1} parent=1 // pred_fallthru
      _
    // Predicated region
    $region14: #{tpu_custom_call.1} parent=1 // pred_check
      _
    $region15: #{tpu_custom_call.1} parent=1 // pred_check_branch
      %34 = sbr.rel (0) target = $region17
    $region16: #{tpu_custom_call.1} parent=1 // pred_region
      %35 = dma.done [#allocation3], 128
    $region17: #{tpu_custom_call.1} parent=1 // pred_fallthru
      _
    // Predicated region
    $region18: #{tpu_custom_call.1} parent=1 // pred_check
      _
    $region19: #{tpu_custom_call.1} parent=1 // pred_check_branch
      %37 = sbr.rel (0) target = $region21
    $region20: #{tpu_custom_call.1} parent=1 // pred_region
      %38 = dma.done [#allocation6], 128
    $region21: #{tpu_custom_call.1} parent=1 // pred_fallthru
      _
    %v39 = vld [vmem:[#allocation2] sm:$0xff]
    %v40 = vld [vmem:[#allocation5] sm:$0xff]
    %v41 = vld [vmem:[%s2] sm:$0x1]
    %v43 = vlaneseq
    %v44 = vshrl.u32 %v43, 7
    %v45 = vsub.s32 0, %v44
    %v46 = vrot.slane %v41, %v45
    %vm48 = vcmask 261120
    %v50 = vsel %vm48, %v39, 0
    %v53 = vsel %vm48, %v40, 0
    %55 = vmatprep.subr.mxu0 0.0
    %56 = vmatpush1.xpose.msra.mxu0 0.0
    %57 = vmatprep.subr.mxu0 0.0
    %58 = vmatpush1.xpose.msra.mxu0 0.0
    %59 = vmatprep.subr.mxu0 0.0
    %60 = vmatpush1.xpose.msra.mxu0 0.0
    %61 = vmatprep.subr.mxu0 0.0
    %62 = vmatpush1.xpose.msra.mxu0 0.0
    %63 = vmatprep.subr.mxu0 0.0
    %64 = vmatpush1.xpose.msra.mxu0 0.0
    %65 = vmatprep.subr.mxu0 0.0
    %66 = vmatpush1.xpose.msra.mxu0 0.0
    %67 = vmatprep.subr.mxu0 0.0
    %68 = vmatpush1.xpose.msra.mxu0 0.0
    %69 = vmatprep.subr.mxu0 0.0
    %70 = vmatpush1.xpose.msra.mxu0 0.0
    %71 = vmatprep.subr.mxu0 0.0
    %72 = vmatpush1.xpose.msra.mxu0 0.0
    %73 = vmatprep.subr.mxu0 0.0
    %74 = vmatpush1.xpose.msra.mxu0 0.0
    %75 = vmatprep.subr.mxu0 0.0
    %76 = vmatpush1.xpose.msra.mxu0 0.0
    %77 = vmatprep.subr.mxu0 0.0
    %78 = vmatpush1.xpose.msra.mxu0 0.0
    %79 = vmatprep.subr.mxu0 0.0
    %80 = vmatpush1.xpose.msra.mxu0 0.0
    %81 = vmatprep.subr.mxu0 0.0
    %82 = vmatpush1.xpose.msra.mxu0 0.0
    %83 = vmatprep.subr.mxu0 0.0
    %84 = vmatpush1.xpose.msra.mxu0 0.0
    %85 = vmatprep.subr.mxu0 0.0
    %86 = vmatpush1.xpose.msra.mxu0 %v53
    %87 = vmatprep.subr.mxu0 0.0
    %88 = vmatpush2.xpose.msra.mxu0 0.0
    %89 = vmatprep.subr.mxu0 0.0
    %90 = vmatpush2.xpose.msra.mxu0 0.0
    %91 = vmatprep.subr.mxu0 0.0
    %92 = vmatpush2.xpose.msra.mxu0 0.0
    %93 = vmatprep.subr.mxu0 0.0
    %94 = vmatpush2.xpose.msra.mxu0 0.0
    %95 = vmatprep.subr.mxu0 0.0
    %96 = vmatpush2.xpose.msra.mxu0 0.0
    %97 = vmatprep.subr.mxu0 0.0
    %98 = vmatpush2.xpose.msra.mxu0 0.0
    %99 = vmatprep.subr.mxu0 0.0
    %100 = vmatpush2.xpose.msra.mxu0 0.0
    %101 = vmatprep.subr.mxu0 0.0
    %102 = vmatpush2.xpose.msra.mxu0 0.0
    %103 = vmatprep.subr.mxu0 0.0
    %104 = vmatpush2.xpose.msra.mxu0 0.0
    %105 = vmatprep.subr.mxu0 0.0
    %106 = vmatpush2.xpose.msra.mxu0 0.0
    %107 = vmatprep.subr.mxu0 0.0
    %108 = vmatpush2.xpose.msra.mxu0 0.0
    %109 = vmatprep.subr.mxu0 0.0
    %110 = vmatpush2.xpose.msra.mxu0 0.0
    %111 = vmatprep.subr.mxu0 0.0
    %112 = vmatpush2.xpose.msra.mxu0 0.0
    %113 = vmatprep.subr.mxu0 0.0
    %114 = vmatpush2.xpose.msra.mxu0 0.0
    %115 = vmatprep.subr.mxu0 0.0
    %116 = vmatpush2.xpose.msra.mxu0 0.0
    %117 = vmatprep.subr.mxu0 0.0
    %118 = vmatpush2.xpose.msra.mxu0 0.0
    %119 = vmatprep.mubr.f32.mxu0 0.0
    %120 = vmatmul.mubr.f32.gmra.mxu0 %v50
    %v121 = vpop.f32.mrf.mxu0
    %v122 = vadd.f32 %v46, %v121
    %v123 = vpop.f32.mrf.mxu0
    %124 = vdwg.mxu0
    %vm125 = vcmask 64512
    %126 = vst.msk [vmem:[#allocation7] sm:$0xff] %vm125, %v122
    // Predicated region
    $region22: #{tpu_custom_call.1} parent=1 // pred_check
      _
    $region23: #{tpu_custom_call.1} parent=1 // pred_check_branch
      %128 = sbr.rel (0) target = $region25
    $region24: #{tpu_custom_call.1} parent=1 // pred_region
      %s130 = ssub.s32 128, 128
      %131 = vsyncadd [#allocation4], %s130
      %s133 = sshll.u32 [#allocation7], 4
      %s134 = int_to_ptr.vmem [resolvable:$true] %s133
      %136 = dma.vmem_to_hbm [thread:$0]  %s134, 128, %s3, [#allocation4]
    $region25: #{tpu_custom_call.1} parent=1 // pred_fallthru
      _
    // Predicated region
    $region26: #{tpu_custom_call.1} parent=1 // pred_check
      _
    $region27: #{tpu_custom_call.1} parent=1 // pred_check_branch
      %138 = sbr.rel (0) target = $region29
    $region28: #{tpu_custom_call.1} parent=1 // pred_region
      %139 = dma.done [#allocation4], 128
    $region29: #{tpu_custom_call.1} parent=1 // pred_fallthru
      _
    %140 = vsyncpa [#allocation3], 1
    %141 = vsyncpa [#allocation6], 1
    %142 = vsyncpa [#allocation4], 1

</llo_original>
